<compile_context>
chip_gen: v5e
topology: v5e:2x2
jax: 0.10.0
libtpu: 0.0.40
codegen_flags: <defaults>
</compile_context>

<pallas_src>
import functools

import jax
import jax.numpy as jnp
from jax.experimental import pallas as pl
from jax.experimental.pallas import tpu as pltpu

LN_EPS = 1e-5
_INV_SQRT2 = 0.7071067811865475
_SQRT_2_OVER_PI = 0.7978845608028654


def _round_up(x, m):
    return ((x + m - 1) // m) * m


def _tpu_generation():
    try:
        kind = jax.devices()[0].device_kind.lower()
    except Exception:
        return "unknown"
    if "v5 lite" in kind or "v5e" in kind or "v5lite" in kind:
        return "v5e"
    if "v6" in kind:
        return "v6e"
    if "v7" in kind:
        return "v7x"
    if "v5" in kind:
        return "v5p"
    return "unknown"


# tm: token-row tile; vmem: scoped VMEM limit; min_row_tiles >= 2 on chips with
# two TensorCores so dimension_semantics=('parallel', ...) actually shards.
_GEN_CFG = {
    "v5e":     dict(tm=128, vmem=100 * 1024 * 1024, min_row_tiles=1),
    "v6e":     dict(tm=256, vmem=100 * 1024 * 1024, min_row_tiles=1),
    "v5p":     dict(tm=256, vmem=100 * 1024 * 1024, min_row_tiles=2),
    "v7x":     dict(tm=256, vmem=48 * 1024 * 1024,  min_row_tiles=2),
    "unknown": dict(tm=128, vmem=64 * 1024 * 1024,  min_row_tiles=1),
}


def _choose_fc(F, target):
    """Largest F-chunk <= target that is either the whole F or a multiple of 128
    dividing F; falls back to `target` (F gets zero-padded)."""
    if F <= target:
        return F
    for cand in range(target, 127, -128):
        if F % cand == 0:
            return cand
    return target


def _ff_kernel(x_ref, g_ref, beta_ref, w1_ref, b1_ref, w2_ref, b2_ref,
               o_ref, ln_ref, acc_ref, *, approx_gelu):
    # Grid: (row tiles [parallel], F chunks [arbitrary]).
    j = pl.program_id(1)

    @pl.when(j == 0)
    def _():
        # LayerNorm (f32 math) once per row tile; keep the result in VMEM in
        # the matmul dtype so every F chunk reuses it as the fc1 LHS.
        xf = x_ref[...].astype(jnp.float32)
        mean = jnp.mean(xf, axis=-1, keepdims=True)
        xc = xf - mean
        var = jnp.mean(xc * xc, axis=-1, keepdims=True)
        ln = xc * jax.lax.rsqrt(var + LN_EPS)
        ln = ln * g_ref[...].astype(jnp.float32) + beta_ref[...].astype(jnp.float32)
        ln_ref[...] = ln.astype(ln_ref.dtype)
        acc_ref[...] = jnp.zeros_like(acc_ref)

    # fc1 chunk: (tm, D) @ (D, Fc) on the MXU, f32 accumulation.
    h = jnp.dot(ln_ref[...], w1_ref[...], preferred_element_type=jnp.float32)
    h = h + b1_ref[...].astype(jnp.float32)
    if approx_gelu:
        # tanh approximation: runs on the EUP (frees the VALU erf polynomial).
        # Semantics change vs torch exact gelu (~1e-3 level).
        inner = _SQRT_2_OVER_PI * (h + 0.044715 * h * h * h)
        hg = 0.5 * h * (1.0 + jnp.tanh(inner))
    else:
        # Exact (erf) GELU — matches torch.nn.functional.gelu default.
        hg = 0.5 * h * (1.0 + jax.lax.erf(h * _INV_SQRT2))

    # fc2 chunk: (tm, Fc) @ (Fc, D), accumulated in f32 scratch.
    acc_ref[...] += jnp.dot(hg.astype(w2_ref.dtype), w2_ref[...],
                            preferred_element_type=jnp.float32)

    @pl.when(j == pl.num_programs(1) - 1)
    def _():
        y = acc_ref[...] + b2_ref[...].astype(jnp.float32)
        # Residual re-reads the (still-resident) x tile; single cast + store.
        o_ref[...] = (x_ref[...].astype(jnp.float32) + y).astype(o_ref.dtype)


def pegasus_layer_ff(hidden_states, gamma, beta, w1, b1, w2, b2, *,
                     tm=None, fc=None,
                     matmul_dtype=jnp.bfloat16,
                     vmem_limit_bytes=None,
                     approx_gelu=False):
    """hidden_states: (B, S, D).
    gamma, beta: (D,); w1: (D, F); b1: (F,); w2: (F, D); b2: (D,).
    (w1/w2 are stored pre-transposed relative to torch's nn.Linear weight.)

    Pass w1/w2 already in `matmul_dtype` (bf16) to avoid a per-call HBM
    round-trip for the cast.  Rows are padded to the row tile, F is padded to
    the F chunk, so any (B, S, F) works; D should be a multiple of 128 for
    lane-dense stores in production.
    """
    B, S, D = hidden_states.shape
    F = w1.shape[1]
    R = B * S

    cfg = _GEN_CFG[_tpu_generation()]
    tm = cfg["tm"] if tm is None else tm
    vmem_limit_bytes = cfg["vmem"] if vmem_limit_bytes is None else vmem_limit_bytes
    min_row_tiles = cfg["min_row_tiles"]

    # Effective row tile: multiple of 8 (sublane), never bigger than needed;
    # split further if the chip has 2 TensorCores and we'd otherwise get a
    # single-step 'parallel' axis.
    tm_eff = min(_round_up(tm, 8), _round_up(R, 8))
    if min_row_tiles > 1 and (_round_up(R, tm_eff) // tm_eff) < min_row_tiles and tm_eff > 8:
        tm_eff = max(_round_up(tm_eff // min_row_tiles, 8), 8)
    R_pad = _round_up(R, tm_eff)

    # F chunk (multiple of 128, or the full F).
    fc_eff = _choose_fc(F, 512 if fc is None else fc)
    F_pad = _round_up(F, fc_eff)

    x2d = hidden_states.reshape(R, D)
    if R_pad != R:
        x2d = jnp.pad(x2d, ((0, R_pad - R), (0, 0)))

    # Cast only if the caller did not pre-cast (hoist this out of hot loops).
    w1c = w1 if w1.dtype == matmul_dtype else w1.astype(matmul_dtype)
    w2c = w2 if w2.dtype == matmul_dtype else w2.astype(matmul_dtype)
    b1c = b1
    if F_pad != F:
        # Zero padding is exact: gelu(0) == 0 and padded W2 rows are zero.
        w1c = jnp.pad(w1c, ((0, 0), (0, F_pad - F)))
        b1c = jnp.pad(b1c, ((0, F_pad - F),))
        w2c = jnp.pad(w2c, ((0, F_pad - F), (0, 0)))

    g2d = gamma.reshape(1, D)
    be2d = beta.reshape(1, D)
    b1_2d = b1c.reshape(1, F_pad)
    b2_2d = b2.reshape(1, D)

    grid = (R_pad // tm_eff, F_pad // fc_eff)

    out = pl.pallas_call(
        functools.partial(_ff_kernel, approx_gelu=approx_gelu),
        out_shape=jax.ShapeDtypeStruct((R_pad, D), hidden_states.dtype),
        grid_spec=pltpu.PrefetchScalarGridSpec(
            num_scalar_prefetch=0,
            grid=grid,
            in_specs=[
                pl.BlockSpec((tm_eff, D), lambda i, j: (i, 0)),      # x tile
                pl.BlockSpec((1, D), lambda i, j: (0, 0)),           # gamma
                pl.BlockSpec((1, D), lambda i, j: (0, 0)),           # beta
                pl.BlockSpec((D, fc_eff), lambda i, j: (0, j)),      # W1 chunk
                pl.BlockSpec((1, fc_eff), lambda i, j: (0, j)),      # b1 chunk
                pl.BlockSpec((fc_eff, D), lambda i, j: (j, 0)),      # W2 chunk
                pl.BlockSpec((1, D), lambda i, j: (0, 0)),           # b2
            ],
            out_specs=pl.BlockSpec((tm_eff, D), lambda i, j: (i, 0)),
            scratch_shapes=[
                pltpu.VMEM((tm_eff, D), matmul_dtype),   # LN(x) tile (fc1 LHS)
                pltpu.VMEM((tm_eff, D), jnp.float32),    # fc2 accumulator
            ],
        ),
        compiler_params=pltpu.CompilerParams(
            dimension_semantics=("parallel", "arbitrary"),
            vmem_limit_bytes=vmem_limit_bytes,
        ),
    )(x2d, g2d, be2d, w1c, b1_2d, w2c, b2_2d)

    if R_pad != R:
        out = out[:R]
    return out.reshape(B, S, D)


def _reference(hidden_states, gamma, beta, w1, b1, w2, b2,
               matmul_dtype=jnp.bfloat16):
    """Pure-JAX reference with the same numerics (bf16 matmul in, f32 acc)."""
    x = hidden_states.astype(jnp.float32)
    mean = jnp.mean(x, axis=-1, keepdims=True)
    var = jnp.mean((x - mean) ** 2, axis=-1, keepdims=True)
    ln = (x - mean) * jax.lax.rsqrt(var + LN_EPS) * gamma + beta
    h = jnp.dot(ln.astype(matmul_dtype), w1.astype(matmul_dtype),
                preferred_element_type=jnp.float32) + b1.astype(jnp.float32)
    h = 0.5 * h * (1.0 + jax.lax.erf(h * _INV_SQRT2))
    y = jnp.dot(h.astype(matmul_dtype), w2.astype(matmul_dtype),
                preferred_element_type=jnp.float32) + b2.astype(jnp.float32)
    return x + y


if __name__ == "__main__":
    key = jax.random.PRNGKey(0)
    B, S, D, F = 2, 8, 128, 256   # batch, seq, d_model, ffn_dim (small test)

    k = jax.random.split(key, 7)
    x = jax.random.normal(k[0], (B, S, D), dtype=jnp.float32)
    gamma = 1.0 + 0.1 * jax.random.normal(k[1], (D,), dtype=jnp.float32)
    beta = 0.1 * jax.random.normal(k[2], (D,), dtype=jnp.float32)
    # Linear weights, stored already transposed for (row @ W) use:
    w1 = 0.1 * jax.random.normal(k[3], (D, F), dtype=jnp.float32)
    b1 = 0.05 * jax.random.normal(k[4], (F,), dtype=jnp.float32)
    w2 = 0.1 * jax.random.normal(k[5], (F, D), dtype=jnp.float32)
    b2 = 0.05 * jax.random.normal(k[6], (D,), dtype=jnp.float32)

    # Pre-cast the matmul weights once (hoisted out of the per-call path).
    w1_bf16 = w1.astype(jnp.bfloat16)
    w2_bf16 = w2.astype(jnp.bfloat16)

    # 1) Defaults: F fits in a single chunk.
    out = pegasus_layer_ff(x, gamma, beta, w1_bf16, b1, w2_bf16, b2)
    out = jax.block_until_ready(out)
    ref = _reference(x, gamma, beta, w1, b1, w2, b2)
    assert out.shape == (B, S, D)
    assert jnp.max(jnp.abs(out - ref)) < 5e-3

    # 2) F-chunked path (fc=128 -> 2 chunks, exercises init/accum/finalize)
    #    plus ragged row count (R=10 -> padded row tile).
    xr = x[:, :5, :]
    out_r = pegasus_layer_ff(xr, gamma, beta, w1_bf16, b1, w2_bf16, b2, fc=128)
    out_r = jax.block_until_ready(out_r)
    ref_r = _reference(xr, gamma, beta, w1, b1, w2, b2)
    assert out_r.shape == (B, 5, D)
    assert jnp.max(jnp.abs(out_r - ref_r)) < 5e-3

    print("KERNEL_OK")
</pallas_src>

<mosaic_0001>
module attributes {stable_mosaic.version = 11 : i64} {
  func.func @_ff_kernel(%arg0: i32, %arg1: i32, %arg2: memref<16x128xf32, #tpu.memory_space<vmem>>, %arg3: memref<1x128xf32, #tpu.memory_space<vmem>>, %arg4: memref<1x128xf32, #tpu.memory_space<vmem>>, %arg5: memref<128x256xbf16, #tpu.memory_space<vmem>>, %arg6: memref<1x256xf32, #tpu.memory_space<vmem>>, %arg7: memref<256x128xbf16, #tpu.memory_space<vmem>>, %arg8: memref<1x128xf32, #tpu.memory_space<vmem>>, %arg9: memref<16x128xf32, #tpu.memory_space<vmem>>, %arg10: memref<16x128xbf16, #tpu.memory_space<vmem>>, %arg11: memref<16x128xf32, #tpu.memory_space<vmem>>) attributes {dimension_semantics = [#tpu.dimension_semantics<parallel>, #tpu.dimension_semantics<arbitrary>], iteration_bounds = array<i64: 1, 1>, scalar_prefetch = 0 : i64, scratch_operands = 2 : i64, tpu.core_type = #tpu.core_type<tc>, window_params = [{transform_indices = @transform_0, window_bounds = array<i64: 16, 128>}, {pipeline_mode = #tpu.pipeline_mode<synchronous>, transform_indices = @transform_1, window_bounds = array<i64: 1, 128>}, {pipeline_mode = #tpu.pipeline_mode<synchronous>, transform_indices = @transform_2, window_bounds = array<i64: 1, 128>}, {transform_indices = @transform_3, window_bounds = array<i64: 128, 256>}, {transform_indices = @transform_4, window_bounds = array<i64: 1, 256>}, {transform_indices = @transform_5, window_bounds = array<i64: 256, 128>}, {pipeline_mode = #tpu.pipeline_mode<synchronous>, transform_indices = @transform_6, window_bounds = array<i64: 1, 128>}, {transform_indices = @transform_7, window_bounds = array<i64: 16, 128>}]} {
    %c0_i32 = arith.constant 0 : i32
    %0 = arith.cmpi eq, %arg1, %c0_i32 : i32
    %1 = arith.extui %0 : i1 to i32
    %c0_i32_0 = arith.constant 0 : i32
    %2 = arith.cmpi ne, %1, %c0_i32_0 : i32
    scf.if %2 {
      %c0_18 = arith.constant 0 : index
      %c0_19 = arith.constant 0 : index
      %26 = vector.load %arg2[%c0_18, %c0_19] : memref<16x128xf32, #tpu.memory_space<vmem>>, vector<16x128xf32>
      %cst_20 = arith.constant dense<0.000000e+00> : vector<16xf32>
      %27 = vector.multi_reduction <add>, %26, %cst_20 [1] : vector<16x128xf32> to vector<16xf32>
      %28 = vector.shape_cast %27 : vector<16xf32> to vector<16x1xf32>
      %cst_21 = arith.constant 1.280000e+02 : f32
      %29 = vector.broadcast %cst_21 : f32 to vector<16x1xf32>
      %30 = arith.divf %28, %29 : vector<16x1xf32>
      %31 = vector.broadcast %30 : vector<16x1xf32> to vector<16x128xf32>
      %32 = arith.subf %26, %31 : vector<16x128xf32>
      %33 = arith.mulf %32, %32 : vector<16x128xf32>
      %cst_22 = arith.constant dense<0.000000e+00> : vector<16xf32>
      %34 = vector.multi_reduction <add>, %33, %cst_22 [1] : vector<16x128xf32> to vector<16xf32>
      %35 = vector.shape_cast %34 : vector<16xf32> to vector<16x1xf32>
      %cst_23 = arith.constant 1.280000e+02 : f32
      %36 = vector.broadcast %cst_23 : f32 to vector<16x1xf32>
      %37 = arith.divf %35, %36 : vector<16x1xf32>
      %cst_24 = arith.constant 9.99999974E-6 : f32
      %38 = vector.broadcast %cst_24 : f32 to vector<16x1xf32>
      %39 = arith.addf %37, %38 : vector<16x1xf32>
      %40 = math.rsqrt %39 : vector<16x1xf32>
      %41 = vector.broadcast %40 : vector<16x1xf32> to vector<16x128xf32>
      %42 = arith.mulf %32, %41 : vector<16x128xf32>
      %c0_25 = arith.constant 0 : index
      %c0_26 = arith.constant 0 : index
      %43 = vector.load %arg3[%c0_25, %c0_26] : memref<1x128xf32, #tpu.memory_space<vmem>>, vector<1x128xf32>
      %44 = vector.broadcast %43 : vector<1x128xf32> to vector<16x128xf32>
      %45 = arith.mulf %42, %44 : vector<16x128xf32>
      %c0_27 = arith.constant 0 : index
      %c0_28 = arith.constant 0 : index
      %46 = vector.load %arg4[%c0_27, %c0_28] : memref<1x128xf32, #tpu.memory_space<vmem>>, vector<1x128xf32>
      %47 = vector.broadcast %46 : vector<1x128xf32> to vector<16x128xf32>
      %48 = arith.addf %45, %47 : vector<16x128xf32>
      %49 = arith.truncf %48 : vector<16x128xf32> to vector<16x128xbf16>
      %c0_29 = arith.constant 0 : index
      %c0_30 = arith.constant 0 : index
      %50 = vector.load %arg10[%c0_29, %c0_30] : memref<16x128xbf16, #tpu.memory_space<vmem>>, vector<16x128xbf16>
      tpu.vector_store %arg10[%c0_29, %c0_30], %49 {strides = array<i32>} : memref<16x128xbf16, #tpu.memory_space<vmem>>, vector<16x128xbf16>,
      %cst_31 = arith.constant 0.000000e+00 : f32
      %51 = vector.broadcast %cst_31 : f32 to vector<16x128xf32>
      %c0_32 = arith.constant 0 : index
      %c0_33 = arith.constant 0 : index
      %52 = vector.load %arg11[%c0_32, %c0_33] : memref<16x128xf32, #tpu.memory_space<vmem>>, vector<16x128xf32>
      tpu.vector_store %arg11[%c0_32, %c0_33], %51 {strides = array<i32>} : memref<16x128xf32, #tpu.memory_space<vmem>>, vector<16x128xf32>,
    } else {
    }
    %c0 = arith.constant 0 : index
    %c0_1 = arith.constant 0 : index
    %3 = vector.load %arg10[%c0, %c0_1] : memref<16x128xbf16, #tpu.memory_space<vmem>>, vector<16x128xbf16>
    %c0_2 = arith.constant 0 : index
    %c0_3 = arith.constant 0 : index
    %4 = vector.load %arg5[%c0_2, %c0_3] : memref<128x256xbf16, #tpu.memory_space<vmem>>, vector<128x256xbf16>
    %cst = arith.constant dense<0.000000e+00> : vector<16x256xf32>
    %5 = tpu.matmul %3, %4, %cst {dimension_numbers = #tpu.dot_dimension_numbers<[1], [0], [0], [1], [0, 0, 1, 1], [], []>} : vector<16x128xbf16>, vector<128x256xbf16>, vector<16x256xf32> -> vector<16x256xf32>
    %c0_4 = arith.constant 0 : index
    %c0_5 = arith.constant 0 : index
    %6 = vector.load %arg6[%c0_4, %c0_5] : memref<1x256xf32, #tpu.memory_space<vmem>>, vector<1x256xf32>
    %7 = vector.broadcast %6 : vector<1x256xf32> to vector<16x256xf32>
    %8 = arith.addf %5, %7 : vector<16x256xf32>
    %cst_6 = arith.constant 5.000000e-01 : f32
    %9 = vector.broadcast %cst_6 : f32 to vector<16x256xf32>
    %10 = arith.mulf %9, %8 : vector<16x256xf32>
    %cst_7 = arith.constant 0.707106769 : f32
    %11 = vector.broadcast %cst_7 : f32 to vector<16x256xf32>
    %12 = arith.mulf %8, %11 : vector<16x256xf32>
    %13 = math.erf %12 : vector<16x256xf32>
    %cst_8 = arith.constant 1.000000e+00 : f32
    %14 = vector.broadcast %cst_8 : f32 to vector<16x256xf32>
    %15 = arith.addf %14, %13 : vector<16x256xf32>
    %16 = arith.mulf %10, %15 : vector<16x256xf32>
    %c0_9 = arith.constant 0 : index
    %c0_10 = arith.constant 0 : index
    %17 = vector.load %arg11[%c0_9, %c0_10] : memref<16x128xf32, #tpu.memory_space<vmem>>, vector<16x128xf32>
    %18 = arith.truncf %16 : vector<16x256xf32> to vector<16x256xbf16>
    %c0_11 = arith.constant 0 : index
    %c0_12 = arith.constant 0 : index
    %19 = vector.load %arg7[%c0_11, %c0_12] : memref<256x128xbf16, #tpu.memory_space<vmem>>, vector<256x128xbf16>
    %cst_13 = arith.constant dense<0.000000e+00> : vector<16x128xf32>
    %20 = tpu.matmul %18, %19, %cst_13 {dimension_numbers = #tpu.dot_dimension_numbers<[1], [0], [0], [1], [0, 0, 1, 1], [], []>} : vector<16x256xbf16>, vector<256x128xbf16>, vector<16x128xf32> -> vector<16x128xf32>
    %21 = arith.addf %17, %20 : vector<16x128xf32>
    %c0_14 = arith.constant 0 : index
    %c0_15 = arith.constant 0 : index
    %22 = vector.load %arg11[%c0_14, %c0_15] : memref<16x128xf32, #tpu.memory_space<vmem>>, vector<16x128xf32>
    tpu.vector_store %arg11[%c0_14, %c0_15], %21 {strides = array<i32>} : memref<16x128xf32, #tpu.memory_space<vmem>>, vector<16x128xf32>,
    %c0_i32_16 = arith.constant 0 : i32
    %23 = arith.cmpi eq, %arg1, %c0_i32_16 : i32
    %24 = arith.extui %23 : i1 to i32
    %c0_i32_17 = arith.constant 0 : i32
    %25 = arith.cmpi ne, %24, %c0_i32_17 : i32
    scf.if %25 {
      %c0_18 = arith.constant 0 : index
      %c0_19 = arith.constant 0 : index
      %26 = vector.load %arg11[%c0_18, %c0_19] : memref<16x128xf32, #tpu.memory_space<vmem>>, vector<16x128xf32>
      %c0_20 = arith.constant 0 : index
      %c0_21 = arith.constant 0 : index
      %27 = vector.load %arg8[%c0_20, %c0_21] : memref<1x128xf32, #tpu.memory_space<vmem>>, vector<1x128xf32>
      %28 = vector.broadcast %27 : vector<1x128xf32> to vector<16x128xf32>
      %29 = arith.addf %26, %28 : vector<16x128xf32>
      %c0_22 = arith.constant 0 : index
      %c0_23 = arith.constant 0 : index
      %30 = vector.load %arg2[%c0_22, %c0_23] : memref<16x128xf32, #tpu.memory_space<vmem>>, vector<16x128xf32>
      %31 = arith.addf %30, %29 : vector<16x128xf32>
      %c0_24 = arith.constant 0 : index
      %c0_25 = arith.constant 0 : index
      %32 = vector.load %arg9[%c0_24, %c0_25] : memref<16x128xf32, #tpu.memory_space<vmem>>, vector<16x128xf32>
      tpu.vector_store %arg9[%c0_24, %c0_25], %31 {strides = array<i32>} : memref<16x128xf32, #tpu.memory_space<vmem>>, vector<16x128xf32>,
    } else {
    }
    return
  }
  func.func @transform_0(%arg0: i32, %arg1: i32) -> (i32, i32) {
    %c0_i32 = arith.constant 0 : i32
    %c0_i32_0 = arith.constant 0 : i32
    return %arg0, %c0_i32 : i32, i32
  }
  func.func @transform_1(%arg0: i32, %arg1: i32) -> (i32, i32) {
    %c0_i32 = arith.constant 0 : i32
    %c0_i32_0 = arith.constant 0 : i32
    %c0_i32_1 = arith.constant 0 : i32
    return %c0_i32, %c0_i32_0 : i32, i32
  }
  func.func @transform_2(%arg0: i32, %arg1: i32) -> (i32, i32) {
    %c0_i32 = arith.constant 0 : i32
    %c0_i32_0 = arith.constant 0 : i32
    %c0_i32_1 = arith.constant 0 : i32
    return %c0_i32, %c0_i32_0 : i32, i32
  }
  func.func @transform_3(%arg0: i32, %arg1: i32) -> (i32, i32) {
    %c0_i32 = arith.constant 0 : i32
    %c0_i32_0 = arith.constant 0 : i32
    return %c0_i32, %arg1 : i32, i32
  }
  func.func @transform_4(%arg0: i32, %arg1: i32) -> (i32, i32) {
    %c0_i32 = arith.constant 0 : i32
    %c0_i32_0 = arith.constant 0 : i32
    return %c0_i32, %arg1 : i32, i32
  }
  func.func @transform_5(%arg0: i32, %arg1: i32) -> (i32, i32) {
    %c0_i32 = arith.constant 0 : i32
    %c0_i32_0 = arith.constant 0 : i32
    return %arg1, %c0_i32 : i32, i32
  }
  func.func @transform_6(%arg0: i32, %arg1: i32) -> (i32, i32) {
    %c0_i32 = arith.constant 0 : i32
    %c0_i32_0 = arith.constant 0 : i32
    %c0_i32_1 = arith.constant 0 : i32
    return %c0_i32, %c0_i32_0 : i32, i32
  }
  func.func @transform_7(%arg0: i32, %arg1: i32) -> (i32, i32) {
    %c0_i32 = arith.constant 0 : i32
    %c0_i32_0 = arith.constant 0 : i32
    return %arg0, %c0_i32 : i32, i32
  }
}

</mosaic_0001>

<llo_original>
// kernel: tpu_custom_call.1
$region0: #{tpu_custom_call.1}
  #allocation0 [shape = 'u32[]', space=smem, size = 0x4, offset = 0x4, fixed_abs, tag = 'smem constant byte address 0x4 - core index']
  #allocation1 [shape = 'u32[72,128]{1,0:T(1,128)}', space=vmem, size = 0x9000, scoped, tag = 'internal scratch']
  #allocation2 [shape = 'bf16[16,128]{1,0:T(8,128)(2,1)}', space=vmem, size = 0x1000, scoped, tag = 'scratch operand']
  #allocation3 [shape = 'f32[16,128]{1,0:T(8,128)}', space=vmem, size = 0x2000, scoped, tag = 'scratch operand']
  %s0 = inlined_call_operand.hbm [shape: f32[16,128], index: 0, kind: input, shape index: {}]
  %s1 = inlined_call_operand.hbm [shape: f32[1,128], index: 1, kind: input, shape index: {}]
  %s2 = inlined_call_operand.vmem [shape: f32[1,128], index: 2, kind: input, shape index: {}]
  %s3 = inlined_call_operand.hbm [shape: bf16[128,256], index: 3, kind: input, shape index: {}]
  %s4 = inlined_call_operand.vmem [shape: f32[1,256], index: 4, kind: input, shape index: {}]
  %s5 = inlined_call_operand.hbm [shape: bf16[256,128], index: 5, kind: input, shape index: {}]
  %s6 = inlined_call_operand.vmem [shape: f32[1,128], index: 6, kind: input, shape index: {}]
  %s7 = inlined_call_operand.hbm [shape: f32[16,128], index: 7, kind: output, shape index: {}]
  %s8 = sld [smem:[#allocation0]]
  $region62: #{tpu_custom_call.1} parent=0
    _
  %s10 = ssub.s32 1, %s8
  %s11 = scalar_select 0, %s10, %s8
  $region1: #{tpu_custom_call.1} parent=0
    #allocation4 [shape = 'u8[8192]{0}', space=vmem, size = 0x2000, scoped, tag = 'input window, operand 0, single buffered']
    #allocation5 [shape = 's32[1]{0}', space=sflag, size = 0x4, scoped, tag = 'scoped memory for tpu_custom_call.1']
    #allocation6 [shape = 's32[1]{0}', space=sflag, size = 0x4, scoped, tag = 'scoped memory for tpu_custom_call.1']
    #allocation7 [shape = 'u8[512]{0}', space=vmem, size = 0x400, scoped, tag = 'input window, operand 1, single buffered']
    #allocation8 [shape = 's32[1]{0}', space=sflag, size = 0x4, scoped, tag = 'scoped memory for tpu_custom_call.1']
    #allocation9 [shape = 'u8[65536]{0}', space=vmem, size = 0x10000, scoped, tag = 'input window, operand 3, single buffered']
    #allocation10 [shape = 'u8[65536]{0}', space=vmem, size = 0x10000, scoped, tag = 'input window, operand 5, single buffered']
    #allocation11 [shape = 's32[1]{0}', space=sflag, size = 0x4, scoped, tag = 'scoped memory for tpu_custom_call.1']
    #allocation12 [shape = 'u8[8192]{0}', space=vmem, size = 0x2000, scoped, tag = 'output window, operand 0, single buffered']
    %12 = vsyncpa [#allocation5], 0
    %13 = vsyncpa [#allocation8], 0
    %14 = vsyncpa [#allocation11], 0
    %15 = vsyncpa [#allocation6], 0
    // Predicated region
    $region2: #{tpu_custom_call.1} parent=1 // pred_check
      _
    $region3: #{tpu_custom_call.1} parent=1 // pred_check_branch
      %17 = sbr.rel (0) target = $region5
    $region4: #{tpu_custom_call.1} parent=1 // pred_region
      %19 = vsyncadd [#allocation5], 0
      %s20 = sshll.u32 %s0, 4
      %s21 = int_to_ptr.hbm [resolvable:$true] %s20
      %s22 = sshll.u32 [#allocation4], 4
      %s23 = int_to_ptr.vmem [resolvable:$true] %s22
      %28 = dma.hbm_to_vmem [thread:$0]  %s21, 256, %s23, [#allocation5], 128, 128, 8
    $region5: #{tpu_custom_call.1} parent=1 // pred_fallthru
      _
    // Predicated region
    $region6: #{tpu_custom_call.1} parent=1 // pred_check
      _
    $region7: #{tpu_custom_call.1} parent=1 // pred_check_branch
      %30 = sbr.rel (0) target = $region9
    $region8: #{tpu_custom_call.1} parent=1 // pred_region
      %32 = vsyncadd [#allocation8], 0
      %s34 = sshll.u32 %s1, 4
      %s35 = int_to_ptr.hbm [resolvable:$true] %s34
      %s36 = sshll.u32 [#allocation7], 4
      %s37 = int_to_ptr.vmem [resolvable:$true] %s36
      %39 = dma.hbm_to_vmem [thread:$0]  %s35, 16, %s37, [#allocation8]
    $region9: #{tpu_custom_call.1} parent=1 // pred_fallthru
      _
    // Predicated region
    $region10: #{tpu_custom_call.1} parent=1 // pred_check
      _
    $region11: #{tpu_custom_call.1} parent=1 // pred_check_branch
      %41 = sbr.rel (0) target = $region13
    $region12: #{tpu_custom_call.1} parent=1 // pred_region
      _
    $region13: #{tpu_custom_call.1} parent=1 // pred_fallthru
      _
    // Predicated region
    $region14: #{tpu_custom_call.1} parent=1 // pred_check
      _
    $region15: #{tpu_custom_call.1} parent=1 // pred_check_branch
      %43 = sbr.rel (0) target = $region17
    $region16: #{tpu_custom_call.1} parent=1 // pred_region
      %45 = vsyncadd [#allocation8], 0
      %s46 = sshll.u32 %s3, 4
      %s47 = int_to_ptr.hbm [resolvable:$true] %s46
      %s48 = sshll.u32 [#allocation9], 4
      %s49 = int_to_ptr.vmem [resolvable:$true] %s48
      %54 = dma.hbm_to_vmem [thread:$0]  %s47, 2048, %s49, [#allocation8], 128, 128, 8
    $region17: #{tpu_custom_call.1} parent=1 // pred_fallthru
      _
    // Predicated region
    $region18: #{tpu_custom_call.1} parent=1 // pred_check
      _
    $region19: #{tpu_custom_call.1} parent=1 // pred_check_branch
      %56 = sbr.rel (0) target = $region21
    $region20: #{tpu_custom_call.1} parent=1 // pred_region
      _
    $region21: #{tpu_custom_call.1} parent=1 // pred_fallthru
      _
    // Predicated region
    $region22: #{tpu_custom_call.1} parent=1 // pred_check
      _
    $region23: #{tpu_custom_call.1} parent=1 // pred_check_branch
      %58 = sbr.rel (0) target = $region25
    $region24: #{tpu_custom_call.1} parent=1 // pred_region
      %60 = vsyncadd [#allocation11], 0
      %s61 = sshll.u32 %s5, 4
      %s62 = int_to_ptr.hbm [resolvable:$true] %s61
      %s63 = sshll.u32 [#allocation10], 4
      %s64 = int_to_ptr.vmem [resolvable:$true] %s63
      %69 = dma.hbm_to_vmem [thread:$0]  %s62, 2048, %s64, [#allocation11], 64, 64, 4
    $region25: #{tpu_custom_call.1} parent=1 // pred_fallthru
      _
    // Predicated region
    $region26: #{tpu_custom_call.1} parent=1 // pred_check
      _
    $region27: #{tpu_custom_call.1} parent=1 // pred_check_branch
      %71 = sbr.rel (0) target = $region29
    $region28: #{tpu_custom_call.1} parent=1 // pred_region
      _
    $region29: #{tpu_custom_call.1} parent=1 // pred_fallthru
      _
    // Predicated region
    $region30: #{tpu_custom_call.1} parent=1 // pred_check
      _
    $region31: #{tpu_custom_call.1} parent=1 // pred_check_branch
      %73 = sbr.rel (0) target = $region33
    $region32: #{tpu_custom_call.1} parent=1 // pred_region
      %75 = dma.done [#allocation5], 256
    $region33: #{tpu_custom_call.1} parent=1 // pred_fallthru
      _
    // Predicated region
    $region34: #{tpu_custom_call.1} parent=1 // pred_check
      _
    $region35: #{tpu_custom_call.1} parent=1 // pred_check_branch
      %77 = sbr.rel (0) target = $region37
    $region36: #{tpu_custom_call.1} parent=1 // pred_region
      %79 = dma.done [#allocation8], 16
    $region37: #{tpu_custom_call.1} parent=1 // pred_fallthru
      _
    // Predicated region
    $region38: #{tpu_custom_call.1} parent=1 // pred_check
      _
    $region39: #{tpu_custom_call.1} parent=1 // pred_check_branch
      %81 = sbr.rel (0) target = $region41
    $region40: #{tpu_custom_call.1} parent=1 // pred_region
      %83 = dma.done [#allocation8], 2048
    $region41: #{tpu_custom_call.1} parent=1 // pred_fallthru
      _
    // Predicated region
    $region42: #{tpu_custom_call.1} parent=1 // pred_check
      _
    $region43: #{tpu_custom_call.1} parent=1 // pred_check_branch
      %85 = sbr.rel (0) target = $region45
    $region44: #{tpu_custom_call.1} parent=1 // pred_region
      %87 = dma.done [#allocation11], 2048
    $region45: #{tpu_custom_call.1} parent=1 // pred_fallthru
      _
    %p88 = scmp.eq.s32.totalorder 0, 0
    // Predicated region
    $region46: #{tpu_custom_call.1} parent=1 // pred_check
      %p89 = pneg %p88
    $region47: #{tpu_custom_call.1} parent=1 // pred_check_branch
      %91 = sbr.rel (%p89) target = $region49
    $region48: #{tpu_custom_call.1} parent=1 // pred_region
      %v92 = vld [vmem:[#allocation4] sm:$0xff]
      %v93 = vld [vmem:[#allocation4 + $0x8] sm:$0xff]
      %94 = vadd.xlane.f32.xlu0 %v92
      %v95 = vpop.xlane.xlu0 %94
      %96 = vadd.xlane.f32.xlu0 %v93
      %v97 = vpop.xlane.xlu0 %96
      %v98 = vrcp.pop 128.0
      %v99 = vmul.f32 128.0, %v98
      %v100 = vsub.f32 1.0, %v99
      %v101 = vmul.f32 %v98, %v100
      %v102 = vadd.f32 %v98, %v101
      %vm103 = vweird.f32 %v98
      %v104 = vsel %vm103, %v98, %v102
      %v105 = vmul.f32 %v95, %v104
      %v106 = vmul.f32 %v97, %v104
      %v107 = vsub.f32 %v92, %v105
      %v108 = vsub.f32 %v93, %v106
      %v109 = vmul.f32 %v107, %v107
      %v110 = vmul.f32 %v108, %v108
      %111 = vadd.xlane.f32.xlu0 %v109
      %v112 = vpop.xlane.xlu0 %111
      %113 = vadd.xlane.f32.xlu0 %v110
      %v114 = vpop.xlane.xlu0 %113
      %v115 = vmul.f32 %v112, %v104
      %v116 = vmul.f32 %v114, %v104
      %v117 = vadd.f32 %v115, 1e-05
      %v118 = vadd.f32 %v116, 1e-05
      %v119 = vrsqrt.pop %v117
      %v120 = vmul.f32 %v119, %v117
      %v121 = vmul.f32 %v120, %v119
      %v122 = vmul.f32 0.5, %v121
      %v123 = vsub.f32 1.5, %v122
      %v124 = vmul.f32 %v119, %v123
      %vm125 = vweird.f32 %v117
      %vm126 = vweird.f32 %v119
      %vm127 = vmor %vm125, %vm126
      %v128 = vsel %vm127, %v119, %v124
      %v129 = vrsqrt.pop %v118
      %v130 = vmul.f32 %v129, %v118
      %v131 = vmul.f32 %v130, %v129
      %v132 = vmul.f32 0.5, %v131
      %v133 = vsub.f32 1.5, %v132
      %v134 = vmul.f32 %v129, %v133
      %vm135 = vweird.f32 %v118
      %vm136 = vweird.f32 %v129
      %vm137 = vmor %vm135, %vm136
      %v138 = vsel %vm137, %v129, %v134
      %v139 = vmul.f32 %v107, %v128
      %v140 = vmul.f32 %v108, %v138
      %v141 = vld [vmem:[#allocation7] sm:$0x1]
      %v143 = vperm.slane %v141, 0
      %v145 = vmul.f32 %v139, %v143
      %v146 = vmul.f32 %v140, %v143
      %v147 = vld [vmem:[%s2] sm:$0x1]
      %v149 = vperm.slane %v147, 0
      %v151 = vadd.f32 %v145, %v149
      %v152 = vadd.f32 %v146, %v149
      %v153 = vpack.c.bf16 %v151, %v151
      %v154 = vpack.c.bf16 %v152, %v152
      %155 = vst [vmem:[#allocation2] sm:$0xf] %v153
      %156 = vst [vmem:[#allocation2 + $0x4] sm:$0xf] %v154
      %157 = vst [vmem:[#allocation3] sm:$0xff] 0.0
      %158 = vst [vmem:[#allocation3 + $0x8] sm:$0xff] 0.0
    $region49: #{tpu_custom_call.1} parent=1 // pred_fallthru
      _
    %v159 = vld [vmem:[#allocation2] sm:$0xf]
    %v160 = vld [vmem:[#allocation2 + $0x4] sm:$0xf]
    %v161 = vld [vmem:[#allocation9] sm:$0xff]
    %v162 = vld [vmem:[#allocation9 + $0x8] sm:$0xff]
    %v163 = vld [vmem:[#allocation9 + $0x10] sm:$0xff]
    %v164 = vld [vmem:[#allocation9 + $0x18] sm:$0xff]
    %v165 = vld [vmem:[#allocation9 + $0x20] sm:$0xff]
    %v166 = vld [vmem:[#allocation9 + $0x28] sm:$0xff]
    %v167 = vld [vmem:[#allocation9 + $0x30] sm:$0xff]
    %v168 = vld [vmem:[#allocation9 + $0x38] sm:$0xff]
    %v169 = vld [vmem:[#allocation9 + $0x40] sm:$0xff]
    %v170 = vld [vmem:[#allocation9 + $0x48] sm:$0xff]
    %v171 = vld [vmem:[#allocation9 + $0x50] sm:$0xff]
    %v172 = vld [vmem:[#allocation9 + $0x58] sm:$0xff]
    %v173 = vld [vmem:[#allocation9 + $0x60] sm:$0xff]
    %v174 = vld [vmem:[#allocation9 + $0x68] sm:$0xff]
    %v175 = vld [vmem:[#allocation9 + $0x70] sm:$0xff]
    %v176 = vld [vmem:[#allocation9 + $0x78] sm:$0xff]
    %v177 = vld [vmem:[%s4] sm:$0x3]
    %v179 = vperm.slane %v177, 0
    %v180 = vperm.slane %v177, 1
    %v185 = vunpack.c.l.b16 %v159
    %v186 = vunpack.c.l.b16 %v160
    %v187 = vpack.c.b16 %v186, %v185
    %v205 = vunpack.c.l.b16 %v161
    %v206 = vunpack.c.h.b16 %v161
    %v207 = vunpack.c.l.b16 %v162
    %v208 = vunpack.c.h.b16 %v162
    %v209 = vunpack.c.l.b16 %v163
    %v210 = vunpack.c.h.b16 %v163
    %v211 = vunpack.c.l.b16 %v164
    %v212 = vunpack.c.h.b16 %v164
    %v213 = vunpack.c.l.b16 %v165
    %v214 = vunpack.c.h.b16 %v165
    %v215 = vunpack.c.l.b16 %v166
    %v216 = vunpack.c.h.b16 %v166
    %v217 = vunpack.c.l.b16 %v167
    %v218 = vunpack.c.h.b16 %v167
    %v219 = vunpack.c.l.b16 %v168
    %v220 = vunpack.c.h.b16 %v168
    %v221 = vunpack.c.l.b16 %v169
    %v222 = vunpack.c.h.b16 %v169
    %v223 = vunpack.c.l.b16 %v170
    %v224 = vunpack.c.h.b16 %v170
    %v225 = vunpack.c.l.b16 %v171
    %v226 = vunpack.c.h.b16 %v171
    %v227 = vunpack.c.l.b16 %v172
    %v228 = vunpack.c.h.b16 %v172
    %v229 = vunpack.c.l.b16 %v173
    %v230 = vunpack.c.h.b16 %v173
    %v231 = vunpack.c.l.b16 %v174
    %v232 = vunpack.c.h.b16 %v174
    %v233 = vunpack.c.l.b16 %v175
    %v234 = vunpack.c.h.b16 %v175
    %v235 = vunpack.c.l.b16 %v176
    %v236 = vunpack.c.h.b16 %v176
    %v237 = vpack.c.b16 %v207, %v205
    %v238 = vpack.c.b16 %v208, %v206
    %v239 = vpack.c.b16 %v211, %v209
    %v240 = vpack.c.b16 %v212, %v210
    %v241 = vpack.c.b16 %v215, %v213
    %v242 = vpack.c.b16 %v216, %v214
    %v243 = vpack.c.b16 %v219, %v217
    %v244 = vpack.c.b16 %v220, %v218
    %v245 = vpack.c.b16 %v223, %v221
    %v246 = vpack.c.b16 %v224, %v222
    %v247 = vpack.c.b16 %v227, %v225
    %v248 = vpack.c.b16 %v228, %v226
    %v249 = vpack.c.b16 %v231, %v229
    %v250 = vpack.c.b16 %v232, %v230
    %v251 = vpack.c.b16 %v235, %v233
    %v252 = vpack.c.b16 %v236, %v234
    %269 = vmatpush.bf16.msra.mxu0 %v251
    %270 = vmatpush.bf16.msra.mxu0 %v249
    %271 = vmatpush.bf16.msra.mxu0 %v247
    %272 = vmatpush.bf16.msra.mxu0 %v245
    %273 = vmatpush.bf16.msra.mxu0 %v243
    %274 = vmatpush.bf16.msra.mxu0 %v241
    %275 = vmatpush.bf16.msra.mxu0 %v239
    %276 = vmatpush.bf16.msra.mxu0 %v237
    %277 = vmatmul.bf16.gmra.mxu0 %v187
    %v278 = vpop.f32.mrf.mxu0
    %v279 = vadd.f32 %v179, %v278
    %v280 = vpop.f32.mrf.mxu0
    %v281 = vadd.f32 %v179, %v280
    %282 = vdwg.mxu0
    %283 = vmatpush.bf16.msra.mxu0 %v252
    %284 = vmatpush.bf16.msra.mxu0 %v250
    %285 = vmatpush.bf16.msra.mxu0 %v248
    %286 = vmatpush.bf16.msra.mxu0 %v246
    %287 = vmatpush.bf16.msra.mxu0 %v244
    %288 = vmatpush.bf16.msra.mxu0 %v242
    %289 = vmatpush.bf16.msra.mxu0 %v240
    %290 = vmatpush.bf16.msra.mxu0 %v238
    %291 = vmatmul.bf16.gmra.mxu0 %v187
    %v292 = vpop.f32.mrf.mxu0
    %v293 = vadd.f32 %v180, %v292
    %v294 = vpop.f32.mrf.mxu0
    %v295 = vadd.f32 %v180, %v294
    %296 = vdwg.mxu0
    %v297 = vmul.f32 %v279, 0.5
    %v298 = vmul.f32 %v293, 0.5
    %v299 = vmul.f32 %v281, 0.5
    %v300 = vmul.f32 %v295, 0.5
    %v301 = vmul.f32 %v279, 0.70710677
    %v302 = vmul.f32 %v293, 0.70710677
    %v303 = vmul.f32 %v281, 0.70710677
    %v304 = vmul.f32 %v295, 0.70710677
    %v305 = vmul.f32 %v301, %v301
    %v306 = vmin.f32 16.0, %v305
    %v307 = vmul.f32 %v306, 2.1237322e-06
    %v308 = vadd.f32 %v307, 0.00028619796
    %v309 = vmul.f32 %v306, %v308
    %v310 = vadd.f32 %v309, 0.0036580483
    %v311 = vmul.f32 %v306, %v310
    %v312 = vadd.f32 %v311, 0.05243302
    %v313 = vmul.f32 %v306, %v312
    %v314 = vadd.f32 %v313, 0.18741608
    %v315 = vmul.f32 %v306, %v314
    %v316 = vadd.f32 %v315, 1.1283791
    %v317 = vmul.f32 %v301, %v316
    %v318 = vmul.f32 %v306, 3.8918573e-05
    %v319 = vadd.f32 %v318, 0.001143296
    %v320 = vmul.f32 %v306, %v319
    %v321 = vadd.f32 %v320, 0.014752088
    %v322 = vmul.f32 %v306, %v321
    %v323 = vadd.f32 %v322, 0.112945676
    %v324 = vmul.f32 %v306, %v323
    %v325 = vadd.f32 %v324, 0.4994258
    %v326 = vmul.f32 %v306, %v325
    %v327 = vadd.f32 %v326, 1.0
    %v328 = vrcp.pop %v327
    %v329 = vmul.f32 %v327, %v328
    %v330 = vsub.f32 1.0, %v329
    %v331 = vmul.f32 %v328, %v330
    %v332 = vadd.f32 %v328, %v331
    %vm333 = vweird.f32 %v327
    %vm334 = vweird.f32 %v328
    %vm335 = vmor %vm333, %vm334
    %v336 = vsel %vm335, %v328, %v332
    %v337 = vand.u32 2147483647, %v327
    %vm338 = vcmp.eq.f32.partialorder %v337, 8.507059e+37
    %v339 = vand.u32 %v327, 2147483648
    %v340 = vor.u32 1.1754944e-38, %v339
    %v341 = vsel %vm338, %v340, %v336
    %v342 = vmul.f32 %v317, %v341
    %v343 = vmin.f32 %v342, 1.0
    %v344 = vmax.f32 %v343, -1.0
    %v345 = vmul.f32 %v302, %v302
    %v346 = vmin.f32 16.0, %v345
    %v347 = vmul.f32 %v346, 2.1237322e-06
    %v348 = vadd.f32 %v347, 0.00028619796
    %v349 = vmul.f32 %v346, %v348
    %v350 = vadd.f32 %v349, 0.0036580483
    %v351 = vmul.f32 %v346, %v350
    %v352 = vadd.f32 %v351, 0.05243302
    %v353 = vmul.f32 %v346, %v352
    %v354 = vadd.f32 %v353, 0.18741608
    %v355 = vmul.f32 %v346, %v354
    %v356 = vadd.f32 %v355, 1.1283791
    %v357 = vmul.f32 %v302, %v356
    %v358 = vmul.f32 %v346, 3.8918573e-05
    %v359 = vadd.f32 %v358, 0.001143296
    %v360 = vmul.f32 %v346, %v359
    %v361 = vadd.f32 %v360, 0.014752088
    %v362 = vmul.f32 %v346, %v361
    %v363 = vadd.f32 %v362, 0.112945676
    %v364 = vmul.f32 %v346, %v363
    %v365 = vadd.f32 %v364, 0.4994258
    %v366 = vmul.f32 %v346, %v365
    %v367 = vadd.f32 %v366, 1.0
    %v368 = vrcp.pop %v367
    %v369 = vmul.f32 %v367, %v368
    %v370 = vsub.f32 1.0, %v369
    %v371 = vmul.f32 %v368, %v370
    %v372 = vadd.f32 %v368, %v371
    %vm373 = vweird.f32 %v367
    %vm374 = vweird.f32 %v368
    %vm375 = vmor %vm373, %vm374
    %v376 = vsel %vm375, %v368, %v372
    %v377 = vand.u32 2147483647, %v367
    %vm378 = vcmp.eq.f32.partialorder %v377, 8.507059e+37
    %v379 = vand.u32 %v367, 2147483648
    %v380 = vor.u32 1.1754944e-38, %v379
    %v381 = vsel %vm378, %v380, %v376
    %v382 = vmul.f32 %v357, %v381
    %v383 = vmin.f32 %v382, 1.0
    %v384 = vmax.f32 %v383, -1.0
    %v385 = vmul.f32 %v303, %v303
    %v386 = vmin.f32 16.0, %v385
    %v387 = vmul.f32 %v386, 2.1237322e-06
    %v388 = vadd.f32 %v387, 0.00028619796
    %v389 = vmul.f32 %v386, %v388
    %v390 = vadd.f32 %v389, 0.0036580483
    %v391 = vmul.f32 %v386, %v390
    %v392 = vadd.f32 %v391, 0.05243302
    %v393 = vmul.f32 %v386, %v392
    %v394 = vadd.f32 %v393, 0.18741608
    %v395 = vmul.f32 %v386, %v394
    %v396 = vadd.f32 %v395, 1.1283791
    %v397 = vmul.f32 %v303, %v396
    %v398 = vmul.f32 %v386, 3.8918573e-05
    %v399 = vadd.f32 %v398, 0.001143296
    %v400 = vmul.f32 %v386, %v399
    %v401 = vadd.f32 %v400, 0.014752088
    %v402 = vmul.f32 %v386, %v401
    %v403 = vadd.f32 %v402, 0.112945676
    %v404 = vmul.f32 %v386, %v403
    %v405 = vadd.f32 %v404, 0.4994258
    %v406 = vmul.f32 %v386, %v405
    %v407 = vadd.f32 %v406, 1.0
    %v408 = vrcp.pop %v407
    %v409 = vmul.f32 %v407, %v408
    %v410 = vsub.f32 1.0, %v409
    %v411 = vmul.f32 %v408, %v410
    %v412 = vadd.f32 %v408, %v411
    %vm413 = vweird.f32 %v407
    %vm414 = vweird.f32 %v408
    %vm415 = vmor %vm413, %vm414
    %v416 = vsel %vm415, %v408, %v412
    %v417 = vand.u32 2147483647, %v407
    %vm418 = vcmp.eq.f32.partialorder %v417, 8.507059e+37
    %v419 = vand.u32 %v407, 2147483648
    %v420 = vor.u32 1.1754944e-38, %v419
    %v421 = vsel %vm418, %v420, %v416
    %v422 = vmul.f32 %v397, %v421
    %v423 = vmin.f32 %v422, 1.0
    %v424 = vmax.f32 %v423, -1.0
    %v425 = vmul.f32 %v304, %v304
    %v426 = vmin.f32 16.0, %v425
    %v427 = vmul.f32 %v426, 2.1237322e-06
    %v428 = vadd.f32 %v427, 0.00028619796
    %v429 = vmul.f32 %v426, %v428
    %v430 = vadd.f32 %v429, 0.0036580483
    %v431 = vmul.f32 %v426, %v430
    %v432 = vadd.f32 %v431, 0.05243302
    %v433 = vmul.f32 %v426, %v432
    %v434 = vadd.f32 %v433, 0.18741608
    %v435 = vmul.f32 %v426, %v434
    %v436 = vadd.f32 %v435, 1.1283791
    %v437 = vmul.f32 %v304, %v436
    %v438 = vmul.f32 %v426, 3.8918573e-05
    %v439 = vadd.f32 %v438, 0.001143296
    %v440 = vmul.f32 %v426, %v439
    %v441 = vadd.f32 %v440, 0.014752088
    %v442 = vmul.f32 %v426, %v441
    %v443 = vadd.f32 %v442, 0.112945676
    %v444 = vmul.f32 %v426, %v443
    %v445 = vadd.f32 %v444, 0.4994258
    %v446 = vmul.f32 %v426, %v445
    %v447 = vadd.f32 %v446, 1.0
    %v448 = vrcp.pop %v447
    %v449 = vmul.f32 %v447, %v448
    %v450 = vsub.f32 1.0, %v449
    %v451 = vmul.f32 %v448, %v450
    %v452 = vadd.f32 %v448, %v451
    %vm453 = vweird.f32 %v447
    %vm454 = vweird.f32 %v448
    %vm455 = vmor %vm453, %vm454
    %v456 = vsel %vm455, %v448, %v452
    %v457 = vand.u32 2147483647, %v447
    %vm458 = vcmp.eq.f32.partialorder %v457, 8.507059e+37
    %v459 = vand.u32 %v447, 2147483648
    %v460 = vor.u32 1.1754944e-38, %v459
    %v461 = vsel %vm458, %v460, %v456
    %v462 = vmul.f32 %v437, %v461
    %v463 = vmin.f32 %v462, 1.0
    %v464 = vmax.f32 %v463, -1.0
    %v465 = vadd.f32 %v344, 1.0
    %v466 = vadd.f32 %v384, 1.0
    %v467 = vadd.f32 %v424, 1.0
    %v468 = vadd.f32 %v464, 1.0
    %v469 = vmul.f32 %v297, %v465
    %v470 = vmul.f32 %v298, %v466
    %v471 = vmul.f32 %v299, %v467
    %v472 = vmul.f32 %v300, %v468
    %v473 = vld [vmem:[#allocation3] sm:$0xff]
    %v474 = vld [vmem:[#allocation3 + $0x8] sm:$0xff]
    %v475 = vpack.c.bf16 %v471, %v469
    %v476 = vpack.c.bf16 %v472, %v470
    %v477 = vld [vmem:[#allocation10] sm:$0xf]
    %v478 = vld [vmem:[#allocation10 + $0x4] sm:$0xf]
    %v479 = vld [vmem:[#allocation10 + $0x8] sm:$0xf]
    %v480 = vld [vmem:[#allocation10 + $0xc] sm:$0xf]
    %v481 = vld [vmem:[#allocation10 + $0x10] sm:$0xf]
    %v482 = vld [vmem:[#allocation10 + $0x14] sm:$0xf]
    %v483 = vld [vmem:[#allocation10 + $0x18] sm:$0xf]
    %v484 = vld [vmem:[#allocation10 + $0x1c] sm:$0xf]
    %v485 = vld [vmem:[#allocation10 + $0x20] sm:$0xf]
    %v486 = vld [vmem:[#allocation10 + $0x24] sm:$0xf]
    %v487 = vld [vmem:[#allocation10 + $0x28] sm:$0xf]
    %v488 = vld [vmem:[#allocation10 + $0x2c] sm:$0xf]
    %v489 = vld [vmem:[#allocation10 + $0x30] sm:$0xf]
    %v490 = vld [vmem:[#allocation10 + $0x34] sm:$0xf]
    %v491 = vld [vmem:[#allocation10 + $0x38] sm:$0xf]
    %v492 = vld [vmem:[#allocation10 + $0x3c] sm:$0xf]
    %v493 = vld [vmem:[#allocation10 + $0x40] sm:$0xf]
    %v494 = vld [vmem:[#allocation10 + $0x44] sm:$0xf]
    %v495 = vld [vmem:[#allocation10 + $0x48] sm:$0xf]
    %v496 = vld [vmem:[#allocation10 + $0x4c] sm:$0xf]
    %v497 = vld [vmem:[#allocation10 + $0x50] sm:$0xf]
    %v498 = vld [vmem:[#allocation10 + $0x54] sm:$0xf]
    %v499 = vld [vmem:[#allocation10 + $0x58] sm:$0xf]
    %v500 = vld [vmem:[#allocation10 + $0x5c] sm:$0xf]
    %v501 = vld [vmem:[#allocation10 + $0x60] sm:$0xf]
    %v502 = vld [vmem:[#allocation10 + $0x64] sm:$0xf]
    %v503 = vld [vmem:[#allocation10 + $0x68] sm:$0xf]
    %v504 = vld [vmem:[#allocation10 + $0x6c] sm:$0xf]
    %v505 = vld [vmem:[#allocation10 + $0x70] sm:$0xf]
    %v506 = vld [vmem:[#allocation10 + $0x74] sm:$0xf]
    %v507 = vld [vmem:[#allocation10 + $0x78] sm:$0xf]
    %v508 = vld [vmem:[#allocation10 + $0x7c] sm:$0xf]
    %v541 = vunpack.c.l.b16 %v477
    %v542 = vunpack.c.l.b16 %v478
    %v543 = vunpack.c.l.b16 %v479
    %v544 = vunpack.c.l.b16 %v480
    %v545 = vunpack.c.l.b16 %v481
    %v546 = vunpack.c.l.b16 %v482
    %v547 = vunpack.c.l.b16 %v483
    %v548 = vunpack.c.l.b16 %v484
    %v549 = vunpack.c.l.b16 %v485
    %v550 = vunpack.c.l.b16 %v486
    %v551 = vunpack.c.l.b16 %v487
    %v552 = vunpack.c.l.b16 %v488
    %v553 = vunpack.c.l.b16 %v489
    %v554 = vunpack.c.l.b16 %v490
    %v555 = vunpack.c.l.b16 %v491
    %v556 = vunpack.c.l.b16 %v492
    %v557 = vunpack.c.l.b16 %v493
    %v558 = vunpack.c.l.b16 %v494
    %v559 = vunpack.c.l.b16 %v495
    %v560 = vunpack.c.l.b16 %v496
    %v561 = vunpack.c.l.b16 %v497
    %v562 = vunpack.c.l.b16 %v498
    %v563 = vunpack.c.l.b16 %v499
    %v564 = vunpack.c.l.b16 %v500
    %v565 = vunpack.c.l.b16 %v501
    %v566 = vunpack.c.l.b16 %v502
    %v567 = vunpack.c.l.b16 %v503
    %v568 = vunpack.c.l.b16 %v504
    %v569 = vunpack.c.l.b16 %v505
    %v570 = vunpack.c.l.b16 %v506
    %v571 = vunpack.c.l.b16 %v507
    %v572 = vunpack.c.l.b16 %v508
    %v573 = vpack.c.b16 %v542, %v541
    %v574 = vpack.c.b16 %v544, %v543
    %v575 = vpack.c.b16 %v546, %v545
    %v576 = vpack.c.b16 %v548, %v547
    %v577 = vpack.c.b16 %v550, %v549
    %v578 = vpack.c.b16 %v552, %v551
    %v579 = vpack.c.b16 %v554, %v553
    %v580 = vpack.c.b16 %v556, %v555
    %v581 = vpack.c.b16 %v558, %v557
    %v582 = vpack.c.b16 %v560, %v559
    %v583 = vpack.c.b16 %v562, %v561
    %v584 = vpack.c.b16 %v564, %v563
    %v585 = vpack.c.b16 %v566, %v565
    %v586 = vpack.c.b16 %v568, %v567
    %v587 = vpack.c.b16 %v570, %v569
    %v588 = vpack.c.b16 %v572, %v571
    %605 = vmatpush.bf16.msra.mxu0 %v580
    %606 = vmatpush.bf16.msra.mxu0 %v579
    %607 = vmatpush.bf16.msra.mxu0 %v578
    %608 = vmatpush.bf16.msra.mxu0 %v577
    %609 = vmatpush.bf16.msra.mxu0 %v576
    %610 = vmatpush.bf16.msra.mxu0 %v575
    %611 = vmatpush.bf16.msra.mxu0 %v574
    %612 = vmatpush.bf16.msra.mxu0 %v573
    %613 = vmatmul.bf16.gmra.mxu0 %v475
    %v614 = vpop.f32.mrf.mxu0
    %v615 = vadd.f32 0.0, %v614
    %v616 = vpop.f32.mrf.mxu0
    %v617 = vadd.f32 0.0, %v616
    %618 = vdwg.mxu0
    %619 = vmatpush.bf16.msra.mxu0 %v588
    %620 = vmatpush.bf16.msra.mxu0 %v587
    %621 = vmatpush.bf16.msra.mxu0 %v586
    %622 = vmatpush.bf16.msra.mxu0 %v585
    %623 = vmatpush.bf16.msra.mxu0 %v584
    %624 = vmatpush.bf16.msra.mxu0 %v583
    %625 = vmatpush.bf16.msra.mxu0 %v582
    %626 = vmatpush.bf16.msra.mxu0 %v581
    %627 = vmatmul.bf16.gmra.mxu0 %v476
    %v628 = vpop.f32.mrf.mxu0
    %v629 = vadd.f32 %v615, %v628
    %v630 = vpop.f32.mrf.mxu0
    %v631 = vadd.f32 %v617, %v630
    %632 = vdwg.mxu0
    %v633 = vadd.f32 %v473, %v629
    %v634 = vadd.f32 %v474, %v631
    %635 = vst [vmem:[#allocation3] sm:$0xff] %v633
    %636 = vst [vmem:[#allocation3 + $0x8] sm:$0xff] %v634
    // Predicated region
    $region50: #{tpu_custom_call.1} parent=1 // pred_check
      %p637 = pneg %p88
    $region51: #{tpu_custom_call.1} parent=1 // pred_check_branch
      %639 = sbr.rel (%p637) target = $region53
    $region52: #{tpu_custom_call.1} parent=1 // pred_region
      %v640 = vld [vmem:[#allocation3] sm:$0xff]
      %v641 = vld [vmem:[#allocation3 + $0x8] sm:$0xff]
      %v642 = vld [vmem:[%s6] sm:$0x1]
      %v644 = vperm.slane %v642, 0
      %v646 = vadd.f32 %v640, %v644
      %v647 = vadd.f32 %v641, %v644
      %v648 = vld [vmem:[#allocation4] sm:$0xff]
      %v649 = vld [vmem:[#allocation4 + $0x8] sm:$0xff]
      %v650 = vadd.f32 %v648, %v646
      %v651 = vadd.f32 %v649, %v647
      %652 = vst [vmem:[#allocation12] sm:$0xff] %v650
      %653 = vst [vmem:[#allocation12 + $0x8] sm:$0xff] %v651
    $region53: #{tpu_custom_call.1} parent=1 // pred_fallthru
      _
    // Predicated region
    $region54: #{tpu_custom_call.1} parent=1 // pred_check
      _
    $region55: #{tpu_custom_call.1} parent=1 // pred_check_branch
      %655 = sbr.rel (0) target = $region57
    $region56: #{tpu_custom_call.1} parent=1 // pred_region
      %657 = vsyncadd [#allocation6], 0
      %s658 = sshll.u32 [#allocation12], 4
      %s659 = int_to_ptr.vmem [resolvable:$true] %s658
      %s660 = sshll.u32 %s7, 4
      %s661 = int_to_ptr.hbm [resolvable:$true] %s660
      %666 = dma.vmem_to_hbm [thread:$0]  %s659, 256, %s661, [#allocation6], 128, 128, 8
    $region57: #{tpu_custom_call.1} parent=1 // pred_fallthru
      _
    // Predicated region
    $region58: #{tpu_custom_call.1} parent=1 // pred_check
      _
    $region59: #{tpu_custom_call.1} parent=1 // pred_check_branch
      %668 = sbr.rel (0) target = $region61
    $region60: #{tpu_custom_call.1} parent=1 // pred_region
      %670 = dma.done [#allocation6], 256
    $region61: #{tpu_custom_call.1} parent=1 // pred_fallthru
      _
    %671 = vsyncpa [#allocation5], 1
    %672 = vsyncpa [#allocation8], 1
    %673 = vsyncpa [#allocation11], 1
    %674 = vsyncpa [#allocation6], 1

</llo_original>
